<compile_context>
chip_gen: v6e
topology: v6e:2x2x1
jax: 0.10.0
libtpu: 0.0.40
codegen_flags: <defaults>
</compile_context>

<pallas_src>
import functools

import jax
import jax.numpy as jnp
from jax.experimental import pallas as pl
from jax.experimental.pallas import tpu as pltpu

BASE_CHANNELS = 24
DEFAULT_CHANNELS_PER_BLOCK = (
    BASE_CHANNELS, 2 * BASE_CHANNELS, 4 * BASE_CHANNELS, 8 * BASE_CHANNELS,
    8 * BASE_CHANNELS, 8 * BASE_CHANNELS, 8 * BASE_CHANNELS, 8 * BASE_CHANNELS,
)
LATENT_DIMS = (1, 1, 1, 1)  # -> 2 * latent_dims[level] = 2 channels per layer

# Per-step input-tile byte target.  Double-buffered this is ~24 MiB:
#   v7x  (64 MiB physical VMEM): fits with headroom, and its 3.2 TB/s HBM
#        makes large tiles essential to amortize the ~0.35 us step overhead.
#   v6e/v5e (128 MiB physical): trivially fits; vmem_limit_bytes is raised
#        explicitly past the 16/32 MiB scoped defaults.
_TARGET_STEP_BYTES = 12 * 1024 * 1024


def _prob_block_kernel(x_ref, w_ref, b_ref, o_ref):
    """One fused affine map per (batch-block, spatial-tile) grid point.

    x_ref: (Nb, C, t_hw)   activation tile (channels on sublanes, pixels on lanes)
    w_ref: (c_out, C)      folded weight (transposed), resident in VMEM
    b_ref: (c_out, 1)      folded bias (f32), resident in VMEM
    o_ref: (Nb, c_out, t_hw)
    """
    w = w_ref[...]
    b = b_ref[...]
    # Nb is small (<= a few); static unrolled loop, each iteration is one
    # lane-dense (c_out, C) x (C, t_hw) MXU matmul with f32 accumulation.
    for bi in range(x_ref.shape[0]):
        y = jnp.dot(w, x_ref[bi], preferred_element_type=jnp.float32) + b
        o_ref[bi] = y.astype(o_ref.dtype)


def init_probabilistic_block_params(key, channels_per_block=DEFAULT_CHANNELS_PER_BLOCK,
                                    latent_dims=LATENT_DIMS, dtype=jnp.float32):
    """Deterministic synthetic init (stands in for orthogonal-normal init).

    Returns list of (w_t, b) with w_t: (C_in, C_out), b: (1, C_out)."""
    params = []
    c_in = channels_per_block[-1]           # 192
    c_out = 2 * latent_dims[0]              # 2
    dims = [(c_in, c_out)]
    for level in range(1, len(latent_dims)):
        d = 2 * latent_dims[level]
        dims.append((d, d))
    for (ci, co) in dims:
        key, kw, kb = jax.random.split(key, 3)
        w_t = (jax.random.normal(kw, (ci, co), dtype) * 0.05).astype(dtype)
        b = (jax.random.normal(kb, (1, co), dtype) * 0.01).astype(dtype)
        params.append((w_t, b))
    return params


def _fold_params(params):
    """Fold the chain of affine layers into one (exact: no nonlinearity).

    Note: folding reassociates the f32 accumulation; differences vs. the
    un-folded chain are at rounding level."""
    w_eff = params[0][0].astype(jnp.float32)          # (C_in, c0)
    b_eff = params[0][1].astype(jnp.float32)          # (1, c0)
    for (w, b) in params[1:]:
        w32 = w.astype(jnp.float32)
        b_eff = b_eff @ w32 + b.astype(jnp.float32)
        w_eff = w_eff @ w32
    # Kernel wants out = W^T x  with x laid out (C, t_hw).
    return w_eff.T, b_eff.reshape(-1, 1)              # (c_out, C_in), (c_out, 1)


def _choose_tiling(N, C, HW, itemsize):
    """Pick (batch_block, spatial_tile, need_pad) from static shapes.

    Goal: each grid step streams a large, fully contiguous activation slab
    (~_TARGET_STEP_BYTES) so the HBM-bound kernel runs near roofline, without
    any jnp.pad extra HBM pass."""
    pix_bytes = C * itemsize
    if HW * pix_bytes <= _TARGET_STEP_BYTES:
        # Whole spatial extent in one tile -> block the batch dim instead so
        # the per-step DMA is still multi-MiB and contiguous (small-HW case).
        t_hw = HW
        nb_cap = max(1, _TARGET_STEP_BYTES // (HW * pix_bytes))
        nb = 1
        for d in range(min(N, nb_cap), 0, -1):
            if N % d == 0:
                nb = d
                break
        return nb, t_hw, False
    # Large HW: biggest multiple-of-128 spatial tile under the target that
    # divides HW exactly (lane-dense, no tail padding, no masked stores).
    cap = max(128, (_TARGET_STEP_BYTES // pix_bytes) // 128 * 128)
    t = min(cap, (HW // 128) * 128)
    while t >= 128:
        if HW % t == 0:
            return 1, t, False
        t -= 128
    # Ragged HW with no 128-aligned divisor: rare fallback, pad the tail tile.
    t_hw = min(cap, pl.cdiv(HW, 128) * 128)
    return 1, t_hw, True


@jax.jit
def probabilistic_block_forward(x_nchw, params):
    """Forward pass matching Probabilistic_block.forward (dim=2), NCHW in/out."""
    N, C, H, W = x_nchw.shape
    HW = H * W
    itemsize = jnp.dtype(x_nchw.dtype).itemsize

    w_eff_t, b_eff = _fold_params(params)             # tiny (2x192) fold, trace-time cheap
    c_out = w_eff_t.shape[0]

    # bf16 activations: keep the (tiny) folded weight in bf16 too so the MXU
    # runs bf16 x bf16 -> f32 with no VPU upcast of the big tile; the bias add
    # and accumulation stay in f32 (works on v5e, which has no bf16 VPU).
    if x_nchw.dtype == jnp.bfloat16:
        w_eff_t = w_eff_t.astype(jnp.bfloat16)

    nb, t_hw, need_pad = _choose_tiling(N, C, HW, itemsize)

    x3 = x_nchw.reshape(N, C, HW)                      # free view, no transpose
    hw_pad = HW
    if need_pad:                                       # rare ragged-HW fallback only
        hw_pad = pl.cdiv(HW, t_hw) * t_hw
        x3 = jnp.pad(x3, ((0, 0), (0, 0), (0, hw_pad - HW)))

    grid = (N // nb, hw_pad // t_hw)

    # Explicit VMEM budget: double-buffered in+out blocks + margin, covers the
    # v5e/v6e scoped defaults and stays under v7x's 64 MiB physical VMEM.
    vmem_limit = 2 * nb * (C + c_out) * t_hw * itemsize + (2 << 20)
    vmem_limit = int(min(max(vmem_limit, 16 << 20), 48 << 20))

    out3 = pl.pallas_call(
        _prob_block_kernel,
        out_shape=jax.ShapeDtypeStruct((N, c_out, hw_pad), x_nchw.dtype),
        grid_spec=pltpu.PrefetchScalarGridSpec(
            num_scalar_prefetch=0,
            grid=grid,
            in_specs=[
                # activation stream: the only pipelined operand, fully
                # contiguous (nb, C, t_hw) slab per step
                pl.BlockSpec((nb, C, t_hw), lambda n, j: (n, 0, j)),
                # folded weight / bias: tiny resident full-array blocks
                pl.BlockSpec(w_eff_t.shape, lambda n, j: (0, 0)),
                pl.BlockSpec(b_eff.shape, lambda n, j: (0, 0)),
            ],
            out_specs=pl.BlockSpec((nb, c_out, t_hw), lambda n, j: (n, 0, j)),
        ),
        # On v7x, switching the leading axis to pltpu.CORE_PARALLEL shards the
        # grid across its 2 TensorCores; kept at "parallel" here for
        # portability across v5e/v6e/v7x.
        compiler_params=pltpu.CompilerParams(
            dimension_semantics=("parallel", "parallel"),
            vmem_limit_bytes=vmem_limit),
    )(x3, w_eff_t, b_eff)

    if need_pad:
        out3 = out3[:, :, :HW]
    return out3.reshape(N, c_out, H, W)                # free reshape back to NCHW


def _reference_forward(x_nchw, params):
    """Pure-JAX reference: chain of 1x1 convs as channel matmuls (un-folded)."""
    N, C, H, W = x_nchw.shape
    y = jnp.transpose(x_nchw, (0, 2, 3, 1)).reshape(-1, C).astype(jnp.float32)
    for (w_t, b) in params:
        y = y @ w_t.astype(jnp.float32) + b.astype(jnp.float32)
    c_out = params[-1][0].shape[1]
    y = y.reshape(N, H, W, c_out).astype(x_nchw.dtype)
    return jnp.transpose(y, (0, 3, 1, 2))


if __name__ == "__main__":
    key = jax.random.PRNGKey(0)
    k_x, k_p = jax.random.split(key)

    # Input: NCHW, C must equal channels_per_block[-1] = 192.
    N, C, H, W = 2, DEFAULT_CHANNELS_PER_BLOCK[-1], 16, 16
    x = jax.random.normal(k_x, (N, C, H, W), jnp.float32)

    params = init_probabilistic_block_params(k_p)

    out = probabilistic_block_forward(x, params)
    out = jax.block_until_ready(out)

    ref = jax.block_until_ready(_reference_forward(x, params))
    assert out.shape == (N, 2, H, W), out.shape
    # Layer folding reassociates f32 accumulation; differences are rounding-level.
    assert jnp.allclose(out, ref, atol=1e-4, rtol=1e-4), \
        float(jnp.max(jnp.abs(out - ref)))

    print("KERNEL_OK")
</pallas_src>

<mosaic_0001>
module attributes {stable_mosaic.version = 11 : i64} {
  func.func @_prob_block_kernel(%arg0: i32, %arg1: i32, %arg2: memref<2x192x256xf32, #tpu.memory_space<vmem>>, %arg3: memref<2x192xf32, #tpu.memory_space<vmem>>, %arg4: memref<2x1xf32, #tpu.memory_space<vmem>>, %arg5: memref<2x2x256xf32, #tpu.memory_space<vmem>>) attributes {dimension_semantics = [#tpu.dimension_semantics<parallel>, #tpu.dimension_semantics<parallel>], iteration_bounds = array<i64: 1, 1>, scalar_prefetch = 0 : i64, scratch_operands = 0 : i64, tpu.core_type = #tpu.core_type<tc>, window_params = [{transform_indices = @transform_0, window_bounds = array<i64: 2, 192, 256>}, {pipeline_mode = #tpu.pipeline_mode<synchronous>, transform_indices = @transform_1, window_bounds = array<i64: 2, 192>}, {pipeline_mode = #tpu.pipeline_mode<synchronous>, transform_indices = @transform_2, window_bounds = array<i64: 2, 1>}, {transform_indices = @transform_3, window_bounds = array<i64: 2, 2, 256>}]} {
    %c0 = arith.constant 0 : index
    %c0_0 = arith.constant 0 : index
    %0 = vector.load %arg3[%c0, %c0_0] : memref<2x192xf32, #tpu.memory_space<vmem>>, vector<2x192xf32>
    %c0_1 = arith.constant 0 : index
    %c0_2 = arith.constant 0 : index
    %1 = vector.load %arg4[%c0_1, %c0_2] : memref<2x1xf32, #tpu.memory_space<vmem>>, vector<2x1xf32>
    %c0_3 = arith.constant 0 : index
    %c0_4 = arith.constant 0 : index
    %c0_5 = arith.constant 0 : index
    %2 = vector.load %arg2[%c0_3, %c0_4, %c0_5] : memref<2x192x256xf32, #tpu.memory_space<vmem>>, vector<1x192x256xf32>
    %3 = vector.shape_cast %2 : vector<1x192x256xf32> to vector<192x256xf32>
    %cst = arith.constant dense<0.000000e+00> : vector<2x256xf32>
    %4 = tpu.matmul %0, %3, %cst {dimension_numbers = #tpu.dot_dimension_numbers<[1], [0], [0], [1], [0, 0, 1, 1], [], []>} : vector<2x192xf32>, vector<192x256xf32>, vector<2x256xf32> -> vector<2x256xf32>
    %5 = vector.broadcast %1 : vector<2x1xf32> to vector<2x256xf32>
    %6 = arith.addf %4, %5 : vector<2x256xf32>
    %c0_6 = arith.constant 0 : index
    %c0_7 = arith.constant 0 : index
    %c0_8 = arith.constant 0 : index
    %7 = vector.load %arg5[%c0_6, %c0_7, %c0_8] : memref<2x2x256xf32, #tpu.memory_space<vmem>>, vector<1x2x256xf32>
    %8 = vector.shape_cast %7 : vector<1x2x256xf32> to vector<2x256xf32>
    %9 = vector.shape_cast %6 : vector<2x256xf32> to vector<1x2x256xf32>
    tpu.vector_store %arg5[%c0_6, %c0_7, %c0_8], %9 {strides = array<i32>} : memref<2x2x256xf32, #tpu.memory_space<vmem>>, vector<1x2x256xf32>,
    %c1 = arith.constant 1 : index
    %c0_9 = arith.constant 0 : index
    %c0_10 = arith.constant 0 : index
    %10 = vector.load %arg2[%c1, %c0_9, %c0_10] : memref<2x192x256xf32, #tpu.memory_space<vmem>>, vector<1x192x256xf32>
    %11 = vector.shape_cast %10 : vector<1x192x256xf32> to vector<192x256xf32>
    %cst_11 = arith.constant dense<0.000000e+00> : vector<2x256xf32>
    %12 = tpu.matmul %0, %11, %cst_11 {dimension_numbers = #tpu.dot_dimension_numbers<[1], [0], [0], [1], [0, 0, 1, 1], [], []>} : vector<2x192xf32>, vector<192x256xf32>, vector<2x256xf32> -> vector<2x256xf32>
    %13 = vector.broadcast %1 : vector<2x1xf32> to vector<2x256xf32>
    %14 = arith.addf %12, %13 : vector<2x256xf32>
    %c1_12 = arith.constant 1 : index
    %c0_13 = arith.constant 0 : index
    %c0_14 = arith.constant 0 : index
    %15 = vector.load %arg5[%c1_12, %c0_13, %c0_14] : memref<2x2x256xf32, #tpu.memory_space<vmem>>, vector<1x2x256xf32>
    %16 = vector.shape_cast %15 : vector<1x2x256xf32> to vector<2x256xf32>
    %17 = vector.shape_cast %14 : vector<2x256xf32> to vector<1x2x256xf32>
    tpu.vector_store %arg5[%c1_12, %c0_13, %c0_14], %17 {strides = array<i32>} : memref<2x2x256xf32, #tpu.memory_space<vmem>>, vector<1x2x256xf32>,
    return
  }
  func.func @transform_0(%arg0: i32, %arg1: i32) -> (i32, i32, i32) {
    %c0_i32 = arith.constant 0 : i32
    %c0_i32_0 = arith.constant 0 : i32
    return %arg0, %c0_i32, %arg1 : i32, i32, i32
  }
  func.func @transform_1(%arg0: i32, %arg1: i32) -> (i32, i32) {
    %c0_i32 = arith.constant 0 : i32
    %c0_i32_0 = arith.constant 0 : i32
    %c0_i32_1 = arith.constant 0 : i32
    return %c0_i32, %c0_i32_0 : i32, i32
  }
  func.func @transform_2(%arg0: i32, %arg1: i32) -> (i32, i32) {
    %c0_i32 = arith.constant 0 : i32
    %c0_i32_0 = arith.constant 0 : i32
    %c0_i32_1 = arith.constant 0 : i32
    return %c0_i32, %c0_i32_0 : i32, i32
  }
  func.func @transform_3(%arg0: i32, %arg1: i32) -> (i32, i32, i32) {
    %c0_i32 = arith.constant 0 : i32
    %c0_i32_0 = arith.constant 0 : i32
    return %arg0, %c0_i32, %arg1 : i32, i32, i32
  }
}

</mosaic_0001>

<llo_original>
// kernel: probabilistic_block_forward.1
$region0: #{probabilistic_block_forward.1}
  #allocation0 [shape = 'u32[]', space=smem, size = 0x4, offset = 0x4, fixed_abs, tag = 'smem constant byte address 0x4 - core index']
  #allocation1 [shape = 'u32[144,128]{1,0:T(1,128)}', space=vmem, size = 0x12000, scoped, tag = 'internal scratch']
  %s0 = inlined_call_operand.vmem [shape: f32[2,192,256], index: 0, kind: input, shape index: {}]
  %s1 = inlined_call_operand.vmem [shape: f32[2,192], index: 1, kind: input, shape index: {}]
  %s2 = inlined_call_operand.vmem [shape: f32[2,1], index: 2, kind: input, shape index: {}]
  %s3 = inlined_call_operand.vmem [shape: f32[2,2,256], index: 3, kind: output, shape index: {}]
  %s4 = sld [smem:[#allocation0]]
  $region22: #{probabilistic_block_forward.1} parent=0
    _
  %s6 = ssub.s32 1, %s4
  %s7 = scalar_select 0, %s6, %s4
  // Predicated region
  $region2: #{probabilistic_block_forward.1} parent=0 // pred_check
    _
  $region3: #{probabilistic_block_forward.1} parent=0 // pred_check_branch
    %9 = sbr.rel (0) target = $region5
  $region4: #{probabilistic_block_forward.1} parent=0 // pred_region
    _
  $region5: #{probabilistic_block_forward.1} parent=0 // pred_fallthru
    _
  // Predicated region
  $region6: #{probabilistic_block_forward.1} parent=0 // pred_check
    _
  $region7: #{probabilistic_block_forward.1} parent=0 // pred_check_branch
    %11 = sbr.rel (0) target = $region9
  $region8: #{probabilistic_block_forward.1} parent=0 // pred_region
    _
  $region9: #{probabilistic_block_forward.1} parent=0 // pred_fallthru
    _
  // Predicated region
  $region10: #{probabilistic_block_forward.1} parent=0 // pred_check
    _
  $region11: #{probabilistic_block_forward.1} parent=0 // pred_check_branch
    %13 = sbr.rel (0) target = $region13
  $region12: #{probabilistic_block_forward.1} parent=0 // pred_region
    _
  $region13: #{probabilistic_block_forward.1} parent=0 // pred_fallthru
    _
  %v14 = vld [vmem:[%s1] sm:$0xf]
  %v15 = vld [vmem:[%s2] sm:$0x3]
  %v16 = vld [vmem:[%s0] sm:$0xff]
  %v17 = vld [vmem:[%s0 + $0x8] sm:$0xff]
  %v18 = vld [vmem:[%s0 + $0x10] sm:$0xff]
  %v19 = vld [vmem:[%s0 + $0x18] sm:$0xff]
  %v20 = vld [vmem:[%s0 + $0x20] sm:$0xff]
  %v21 = vld [vmem:[%s0 + $0x28] sm:$0xff]
  %v22 = vld [vmem:[%s0 + $0x30] sm:$0xff]
  %v23 = vld [vmem:[%s0 + $0x38] sm:$0xff]
  %v24 = vld [vmem:[%s0 + $0x40] sm:$0xff]
  %v25 = vld [vmem:[%s0 + $0x48] sm:$0xff]
  %v26 = vld [vmem:[%s0 + $0x50] sm:$0xff]
  %v27 = vld [vmem:[%s0 + $0x58] sm:$0xff]
  %v28 = vld [vmem:[%s0 + $0x60] sm:$0xff]
  %v29 = vld [vmem:[%s0 + $0x68] sm:$0xff]
  %v30 = vld [vmem:[%s0 + $0x70] sm:$0xff]
  %v31 = vld [vmem:[%s0 + $0x78] sm:$0xff]
  %v32 = vld [vmem:[%s0 + $0x80] sm:$0xff]
  %v33 = vld [vmem:[%s0 + $0x88] sm:$0xff]
  %v34 = vld [vmem:[%s0 + $0x90] sm:$0xff]
  %v35 = vld [vmem:[%s0 + $0x98] sm:$0xff]
  %v36 = vld [vmem:[%s0 + $0xa0] sm:$0xff]
  %v37 = vld [vmem:[%s0 + $0xa8] sm:$0xff]
  %v38 = vld [vmem:[%s0 + $0xb0] sm:$0xff]
  %v39 = vld [vmem:[%s0 + $0xb8] sm:$0xff]
  %v40 = vld [vmem:[%s0 + $0xc0] sm:$0xff]
  %v41 = vld [vmem:[%s0 + $0xc8] sm:$0xff]
  %v42 = vld [vmem:[%s0 + $0xd0] sm:$0xff]
  %v43 = vld [vmem:[%s0 + $0xd8] sm:$0xff]
  %v44 = vld [vmem:[%s0 + $0xe0] sm:$0xff]
  %v45 = vld [vmem:[%s0 + $0xe8] sm:$0xff]
  %v46 = vld [vmem:[%s0 + $0xf0] sm:$0xff]
  %v47 = vld [vmem:[%s0 + $0xf8] sm:$0xff]
  %v48 = vld [vmem:[%s0 + $0x100] sm:$0xff]
  %v49 = vld [vmem:[%s0 + $0x108] sm:$0xff]
  %v50 = vld [vmem:[%s0 + $0x110] sm:$0xff]
  %v51 = vld [vmem:[%s0 + $0x118] sm:$0xff]
  %v52 = vld [vmem:[%s0 + $0x120] sm:$0xff]
  %v53 = vld [vmem:[%s0 + $0x128] sm:$0xff]
  %v54 = vld [vmem:[%s0 + $0x130] sm:$0xff]
  %v55 = vld [vmem:[%s0 + $0x138] sm:$0xff]
  %v56 = vld [vmem:[%s0 + $0x140] sm:$0xff]
  %v57 = vld [vmem:[%s0 + $0x148] sm:$0xff]
  %v58 = vld [vmem:[%s0 + $0x150] sm:$0xff]
  %v59 = vld [vmem:[%s0 + $0x158] sm:$0xff]
  %v60 = vld [vmem:[%s0 + $0x160] sm:$0xff]
  %v61 = vld [vmem:[%s0 + $0x168] sm:$0xff]
  %v62 = vld [vmem:[%s0 + $0x170] sm:$0xff]
  %v63 = vld [vmem:[%s0 + $0x178] sm:$0xff]
  %65 = vset.pattern.permute.xlu0 0
  %66 = vperm.xlu0 %65, %v15
  %v67 = vpop.permute.xlu0 %66
  %v71 = vunpack.c.l.s4 1983009808
  %v72 = vunpack.c.0.s8 %v71
  %v73 = vlaneseq
  %v74 = vshrl.u32 %v73, 7
  %v75 = vsub.s32 %v72, %v74
  %v76 = vrot.slane %v14, %v75
  %v77 = vcombine.high %v76, %v76
  %vm79 = vcmask 523264
  %v80 = vsel %vm79, %v77, 0
  %82 = vmatprep.subr.mxu0 %v47
  %83 = vmatpush1.msra.mxu0 %v46
  %84 = vmatprep.subr.mxu0 %v45
  %85 = vmatpush1.msra.mxu0 %v44
  %86 = vmatprep.subr.mxu0 %v43
  %87 = vmatpush1.msra.mxu0 %v42
  %88 = vmatprep.subr.mxu0 %v41
  %89 = vmatpush1.msra.mxu0 %v40
  %90 = vmatprep.subr.mxu0 %v39
  %91 = vmatpush1.msra.mxu0 %v38
  %92 = vmatprep.subr.mxu0 %v37
  %93 = vmatpush1.msra.mxu0 %v36
  %94 = vmatprep.subr.mxu0 %v35
  %95 = vmatpush1.msra.mxu0 %v34
  %96 = vmatprep.subr.mxu0 %v33
  %97 = vmatpush1.msra.mxu0 %v32
  %98 = vmatprep.subr.mxu0 %v31
  %99 = vmatpush1.msra.mxu0 %v30
  %100 = vmatprep.subr.mxu0 %v29
  %101 = vmatpush1.msra.mxu0 %v28
  %102 = vmatprep.subr.mxu0 %v27
  %103 = vmatpush1.msra.mxu0 %v26
  %104 = vmatprep.subr.mxu0 %v25
  %105 = vmatpush1.msra.mxu0 %v24
  %106 = vmatprep.subr.mxu0 %v23
  %107 = vmatpush1.msra.mxu0 %v22
  %108 = vmatprep.subr.mxu0 %v21
  %109 = vmatpush1.msra.mxu0 %v20
  %110 = vmatprep.subr.mxu0 %v19
  %111 = vmatpush1.msra.mxu0 %v18
  %112 = vmatprep.subr.mxu0 %v17
  %113 = vmatpush1.msra.mxu0 %v16
  %114 = vmatprep.subr.mxu0 0.0
  %115 = vmatpush2.msra.mxu0 0.0
  %116 = vmatprep.subr.mxu0 0.0
  %117 = vmatpush2.msra.mxu0 0.0
  %118 = vmatprep.subr.mxu0 0.0
  %119 = vmatpush2.msra.mxu0 0.0
  %120 = vmatprep.subr.mxu0 0.0
  %121 = vmatpush2.msra.mxu0 0.0
  %122 = vmatprep.subr.mxu0 0.0
  %123 = vmatpush2.msra.mxu0 0.0
  %124 = vmatprep.subr.mxu0 0.0
  %125 = vmatpush2.msra.mxu0 0.0
  %126 = vmatprep.subr.mxu0 0.0
  %127 = vmatpush2.msra.mxu0 0.0
  %128 = vmatprep.subr.mxu0 0.0
  %129 = vmatpush2.msra.mxu0 0.0
  %130 = vmatprep.subr.mxu0 %v63
  %131 = vmatpush2.msra.mxu0 %v62
  %132 = vmatprep.subr.mxu0 %v61
  %133 = vmatpush2.msra.mxu0 %v60
  %134 = vmatprep.subr.mxu0 %v59
  %135 = vmatpush2.msra.mxu0 %v58
  %136 = vmatprep.subr.mxu0 %v57
  %137 = vmatpush2.msra.mxu0 %v56
  %138 = vmatprep.subr.mxu0 %v55
  %139 = vmatpush2.msra.mxu0 %v54
  %140 = vmatprep.subr.mxu0 %v53
  %141 = vmatpush2.msra.mxu0 %v52
  %142 = vmatprep.subr.mxu0 %v51
  %143 = vmatpush2.msra.mxu0 %v50
  %144 = vmatprep.subr.mxu0 %v49
  %145 = vmatpush2.msra.mxu0 %v48
  %146 = vmatprep.mubr.f32.mxu0 %v80
  %147 = vmatmul.mubr.f32.gmra.mxu0 %v76
  %v148 = vpop.f32.mrf.mxu0
  %v149 = vadd.f32 %v67, %v148
  %v150 = vpop.f32.mrf.mxu0
  %v151 = vadd.f32 %v67, %v150
  %152 = vdwg.mxu0
  %v155 = vcombine.low %v149, %v151
  %v157 = vunpack.c.l.s4 1983009808
  %v158 = vunpack.c.0.s8 %v157
  %v159 = vlaneseq
  %v160 = vshrl.u32 %v159, 7
  %v161 = vsub.s32 %v158, %v160
  %v162 = vrot.slane %v155, %v161
  %164 = vst [vmem:[%s3] sm:$0xf] %v162
  %s165 = scalar_lea.vmem %s0, 384
  %v166 = vld [vmem:[%s165] sm:$0xff]
  %v167 = vld [vmem:[%s165 + $0x8] sm:$0xff]
  %v168 = vld [vmem:[%s165 + $0x10] sm:$0xff]
  %v169 = vld [vmem:[%s165 + $0x18] sm:$0xff]
  %v170 = vld [vmem:[%s165 + $0x20] sm:$0xff]
  %v171 = vld [vmem:[%s165 + $0x28] sm:$0xff]
  %v172 = vld [vmem:[%s165 + $0x30] sm:$0xff]
  %v173 = vld [vmem:[%s165 + $0x38] sm:$0xff]
  %v174 = vld [vmem:[%s165 + $0x40] sm:$0xff]
  %v175 = vld [vmem:[%s165 + $0x48] sm:$0xff]
  %v176 = vld [vmem:[%s165 + $0x50] sm:$0xff]
  %v177 = vld [vmem:[%s165 + $0x58] sm:$0xff]
  %v178 = vld [vmem:[%s165 + $0x60] sm:$0xff]
  %v179 = vld [vmem:[%s165 + $0x68] sm:$0xff]
  %v180 = vld [vmem:[%s165 + $0x70] sm:$0xff]
  %v181 = vld [vmem:[%s165 + $0x78] sm:$0xff]
  %v182 = vld [vmem:[%s165 + $0x80] sm:$0xff]
  %v183 = vld [vmem:[%s165 + $0x88] sm:$0xff]
  %v184 = vld [vmem:[%s165 + $0x90] sm:$0xff]
  %v185 = vld [vmem:[%s165 + $0x98] sm:$0xff]
  %v186 = vld [vmem:[%s165 + $0xa0] sm:$0xff]
  %v187 = vld [vmem:[%s165 + $0xa8] sm:$0xff]
  %v188 = vld [vmem:[%s165 + $0xb0] sm:$0xff]
  %v189 = vld [vmem:[%s165 + $0xb8] sm:$0xff]
  %v190 = vld [vmem:[%s165 + $0xc0] sm:$0xff]
  %v191 = vld [vmem:[%s165 + $0xc8] sm:$0xff]
  %v192 = vld [vmem:[%s165 + $0xd0] sm:$0xff]
  %v193 = vld [vmem:[%s165 + $0xd8] sm:$0xff]
  %v194 = vld [vmem:[%s165 + $0xe0] sm:$0xff]
  %v195 = vld [vmem:[%s165 + $0xe8] sm:$0xff]
  %v196 = vld [vmem:[%s165 + $0xf0] sm:$0xff]
  %v197 = vld [vmem:[%s165 + $0xf8] sm:$0xff]
  %v198 = vld [vmem:[%s165 + $0x100] sm:$0xff]
  %v199 = vld [vmem:[%s165 + $0x108] sm:$0xff]
  %v200 = vld [vmem:[%s165 + $0x110] sm:$0xff]
  %v201 = vld [vmem:[%s165 + $0x118] sm:$0xff]
  %v202 = vld [vmem:[%s165 + $0x120] sm:$0xff]
  %v203 = vld [vmem:[%s165 + $0x128] sm:$0xff]
  %v204 = vld [vmem:[%s165 + $0x130] sm:$0xff]
  %v205 = vld [vmem:[%s165 + $0x138] sm:$0xff]
  %v206 = vld [vmem:[%s165 + $0x140] sm:$0xff]
  %v207 = vld [vmem:[%s165 + $0x148] sm:$0xff]
  %v208 = vld [vmem:[%s165 + $0x150] sm:$0xff]
  %v209 = vld [vmem:[%s165 + $0x158] sm:$0xff]
  %v210 = vld [vmem:[%s165 + $0x160] sm:$0xff]
  %v211 = vld [vmem:[%s165 + $0x168] sm:$0xff]
  %v212 = vld [vmem:[%s165 + $0x170] sm:$0xff]
  %v213 = vld [vmem:[%s165 + $0x178] sm:$0xff]
  %214 = vmatprep.subr.mxu0 %v197
  %215 = vmatpush1.msra.mxu0 %v196
  %216 = vmatprep.subr.mxu0 %v195
  %217 = vmatpush1.msra.mxu0 %v194
  %218 = vmatprep.subr.mxu0 %v193
  %219 = vmatpush1.msra.mxu0 %v192
  %220 = vmatprep.subr.mxu0 %v191
  %221 = vmatpush1.msra.mxu0 %v190
  %222 = vmatprep.subr.mxu0 %v189
  %223 = vmatpush1.msra.mxu0 %v188
  %224 = vmatprep.subr.mxu0 %v187
  %225 = vmatpush1.msra.mxu0 %v186
  %226 = vmatprep.subr.mxu0 %v185
  %227 = vmatpush1.msra.mxu0 %v184
  %228 = vmatprep.subr.mxu0 %v183
  %229 = vmatpush1.msra.mxu0 %v182
  %230 = vmatprep.subr.mxu0 %v181
  %231 = vmatpush1.msra.mxu0 %v180
  %232 = vmatprep.subr.mxu0 %v179
  %233 = vmatpush1.msra.mxu0 %v178
  %234 = vmatprep.subr.mxu0 %v177
  %235 = vmatpush1.msra.mxu0 %v176
  %236 = vmatprep.subr.mxu0 %v175
  %237 = vmatpush1.msra.mxu0 %v174
  %238 = vmatprep.subr.mxu0 %v173
  %239 = vmatpush1.msra.mxu0 %v172
  %240 = vmatprep.subr.mxu0 %v171
  %241 = vmatpush1.msra.mxu0 %v170
  %242 = vmatprep.subr.mxu0 %v169
  %243 = vmatpush1.msra.mxu0 %v168
  %244 = vmatprep.subr.mxu0 %v167
  %245 = vmatpush1.msra.mxu0 %v166
  %246 = vmatprep.subr.mxu0 0.0
  %247 = vmatpush2.msra.mxu0 0.0
  %248 = vmatprep.subr.mxu0 0.0
  %249 = vmatpush2.msra.mxu0 0.0
  %250 = vmatprep.subr.mxu0 0.0
  %251 = vmatpush2.msra.mxu0 0.0
  %252 = vmatprep.subr.mxu0 0.0
  %253 = vmatpush2.msra.mxu0 0.0
  %254 = vmatprep.subr.mxu0 0.0
  %255 = vmatpush2.msra.mxu0 0.0
  %256 = vmatprep.subr.mxu0 0.0
  %257 = vmatpush2.msra.mxu0 0.0
  %258 = vmatprep.subr.mxu0 0.0
  %259 = vmatpush2.msra.mxu0 0.0
  %260 = vmatprep.subr.mxu0 0.0
  %261 = vmatpush2.msra.mxu0 0.0
  %262 = vmatprep.subr.mxu0 %v213
  %263 = vmatpush2.msra.mxu0 %v212
  %264 = vmatprep.subr.mxu0 %v211
  %265 = vmatpush2.msra.mxu0 %v210
  %266 = vmatprep.subr.mxu0 %v209
  %267 = vmatpush2.msra.mxu0 %v208
  %268 = vmatprep.subr.mxu0 %v207
  %269 = vmatpush2.msra.mxu0 %v206
  %270 = vmatprep.subr.mxu0 %v205
  %271 = vmatpush2.msra.mxu0 %v204
  %272 = vmatprep.subr.mxu0 %v203
  %273 = vmatpush2.msra.mxu0 %v202
  %274 = vmatprep.subr.mxu0 %v201
  %275 = vmatpush2.msra.mxu0 %v200
  %276 = vmatprep.subr.mxu0 %v199
  %277 = vmatpush2.msra.mxu0 %v198
  %278 = vmatprep.mubr.f32.mxu0 %v80
  %279 = vmatmul.mubr.f32.gmra.mxu0 %v76
  %v280 = vpop.f32.mrf.mxu0
  %v281 = vadd.f32 %v67, %v280
  %v282 = vpop.f32.mrf.mxu0
  %v283 = vadd.f32 %v67, %v282
  %284 = vdwg.mxu0
  %v287 = vcombine.low %v281, %v283
  %v289 = vunpack.c.l.s4 1983009808
  %v290 = vunpack.c.0.s8 %v289
  %v291 = vlaneseq
  %v292 = vshrl.u32 %v291, 7
  %v293 = vsub.s32 %v290, %v292
  %v294 = vrot.slane %v287, %v293
  %s296 = scalar_lea.vmem %s3, 4
  %297 = vst [vmem:[%s296] sm:$0xf] %v294
  // Predicated region
  $region14: #{probabilistic_block_forward.1} parent=0 // pred_check
    _
  $region15: #{probabilistic_block_forward.1} parent=0 // pred_check_branch
    %299 = sbr.rel (0) target = $region17
  $region16: #{probabilistic_block_forward.1} parent=0 // pred_region
    _
  $region17: #{probabilistic_block_forward.1} parent=0 // pred_fallthru
    _
  // Predicated region
  $region18: #{probabilistic_block_forward.1} parent=0 // pred_check
    _
  $region19: #{probabilistic_block_forward.1} parent=0 // pred_check_branch
    %301 = sbr.rel (0) target = $region21
  $region20: #{probabilistic_block_forward.1} parent=0 // pred_region
    _
  $region21: #{probabilistic_block_forward.1} parent=0 // pred_fallthru
    _

</llo_original>
